<compile_context>
chip_gen: v5e
topology: v5e:2x2
jax: 0.10.0
libtpu: 0.0.40
codegen_flags: <defaults>
</compile_context>

<pallas_src>
import jax
import jax.numpy as jnp
from jax.experimental import pallas as pl
from jax.experimental.pallas import tpu as pltpu


def text_embedder_kernel(tok_ref, w_ref, b_ref, out_ref):
    # tok_ref: (B_tile, L, H) f32 token embeddings from the (external) BERT encoder.
    x = tok_ref[...]
    L = x.shape[1]
    # [CLS]/[SEP]-stripped pooling: full-tile sum + endpoint subtraction instead
    # of an unaligned [1:-1] sublane slice. The 1/(L-2) scale is pre-folded into
    # w_ref by the wrapper, so only the sum remains here (f32 on the VPU/XLU).
    pooled = jnp.sum(x, axis=1) - x[:, 0, :] - x[:, L - 1, :]        # (B_tile, H) f32
    # Linear(768 -> D) on the MXU: bf16 operands, f32 accumulation.
    out_ref[...] = (
        jnp.dot(pooled.astype(w_ref.dtype), w_ref[...],
                preferred_element_type=jnp.float32)
        + b_ref[...]
    )
    # Dropout(p=0.1) is identity at inference.
    # TODO(synk): training-mode dropout (mask + 1/(1-p) scale) not implemented.


def text_embedder(token_embeddings, fc_weight, fc_bias, *, b_tile=None):
    """token_embeddings: (B, L, 768), fc_weight: (768, D), fc_bias: (D,) -> (B, D)."""
    B, L, H = token_embeddings.shape
    D = fc_weight.shape[1]
    assert L >= 3, "need at least [CLS], one real token, and [SEP]"
    # TODO(synk): fixed L per batch; variable-length texts need per-example
    # lengths / an attention mask for the mean (HF pipeline pads for B>1).

    # Fold the mean-pool scale into the projection weight and ship it as bf16
    # (f32 accumulation retained inside the kernel).
    w_scaled = (fc_weight * (1.0 / (L - 2))).astype(jnp.bfloat16)
    b2 = fc_bias.reshape(1, D).astype(jnp.float32)

    # B-tile: multiple of 8 sublanes (unmasked stores, full MXU rows), capped so
    # double-buffered token tiles + resident W fit v7x's default scoped VMEM.
    if b_tile is None:
        b_tile = 256 if B >= 256 else ((B + 7) // 8) * 8
    B_pad = ((B + b_tile - 1) // b_tile) * b_tile
    if B_pad != B:
        token_embeddings = jnp.pad(
            token_embeddings, ((0, B_pad - B), (0, 0), (0, 0)))

    out = pl.pallas_call(
        text_embedder_kernel,
        out_shape=jax.ShapeDtypeStruct((B_pad, D), jnp.float32),
        grid=(B_pad // b_tile,),
        in_specs=[
            pl.BlockSpec((b_tile, L, H), lambda i: (i, 0, 0)),  # token tile i
            pl.BlockSpec((H, D), lambda i: (0, 0)),             # resident bf16 weight
            pl.BlockSpec((1, D), lambda i: (0, 0)),             # resident bias
        ],
        out_specs=pl.BlockSpec((b_tile, D), lambda i: (i, 0)),
        compiler_params=pltpu.CompilerParams(
            dimension_semantics=("parallel",)),
    )(token_embeddings, w_scaled, b2)
    return out[:B]


# ------------------------- pure-JAX reference -------------------------
def reference(token_embeddings, fc_weight, fc_bias):
    pooled = jnp.mean(token_embeddings[:, 1:-1, :], axis=1)   # drop [CLS]/[SEP]
    return pooled @ fc_weight + fc_bias                       # dropout = identity


if __name__ == "__main__":
    # B texts, L BERT tokens each (incl. [CLS]/[SEP]), H=768 BERT hidden,
    # D=128 embedding_dim (lane-dense output).
    B, L, H, D = 2, 8, 768, 128

    key = jax.random.PRNGKey(0)
    k1, k2, k3 = jax.random.split(key, 3)

    # TODO(synk): the HuggingFace 'feature-extraction' BERT pipeline (tokenizer +
    # pretrained 12-layer encoder) has no Pallas equivalent; its per-token output
    # embeddings are simulated with deterministic random data here.
    token_embeddings = jax.random.normal(k1, (B, L, H), jnp.float32)
    fc_weight = jax.random.normal(k2, (H, D), jnp.float32) * 0.02   # nn.Linear weight.T
    fc_bias = jax.random.normal(k3, (D,), jnp.float32) * 0.02       # nn.Linear bias

    out = text_embedder(token_embeddings, fc_weight, fc_bias)
    out = jax.block_until_ready(out)

    ref = reference(token_embeddings, fc_weight, fc_bias)
    assert out.shape == (B, D)
    # bf16 weight / bf16 pooled operand (f32 accumulation) -> relaxed tolerance.
    assert jnp.allclose(out, ref, rtol=1e-2, atol=1e-2)

    print("KERNEL_OK")
</pallas_src>

<mosaic_0001>
module attributes {stable_mosaic.version = 11 : i64} {
  func.func @text_embedder_kernel(%arg0: i32, %arg1: memref<8x8x768xf32, #tpu.memory_space<vmem>>, %arg2: memref<768x128xbf16, #tpu.memory_space<vmem>>, %arg3: memref<1x128xf32, #tpu.memory_space<vmem>>, %arg4: memref<8x128xf32, #tpu.memory_space<vmem>>) attributes {dimension_semantics = [#tpu.dimension_semantics<parallel>], iteration_bounds = array<i64: 1>, scalar_prefetch = 0 : i64, scratch_operands = 0 : i64, tpu.core_type = #tpu.core_type<tc>, window_params = [{transform_indices = @transform_0, window_bounds = array<i64: 8, 8, 768>}, {pipeline_mode = #tpu.pipeline_mode<synchronous>, transform_indices = @transform_1, window_bounds = array<i64: 768, 128>}, {pipeline_mode = #tpu.pipeline_mode<synchronous>, transform_indices = @transform_2, window_bounds = array<i64: 1, 128>}, {transform_indices = @transform_3, window_bounds = array<i64: 8, 128>}]} {
    %c0 = arith.constant 0 : index
    %c0_0 = arith.constant 0 : index
    %c0_1 = arith.constant 0 : index
    %0 = vector.load %arg1[%c0, %c0_0, %c0_1] : memref<8x8x768xf32, #tpu.memory_space<vmem>>, vector<8x8x768xf32>
    %cst = arith.constant dense<0.000000e+00> : vector<8x768xf32>
    %1 = vector.multi_reduction <add>, %0, %cst [1] : vector<8x8x768xf32> to vector<8x768xf32>
    %2 = vector.extract_strided_slice %0 {offsets = [0, 0, 0], sizes = [8, 1, 768], strides = [1, 1, 1]} : vector<8x8x768xf32> to vector<8x1x768xf32>
    %3 = vector.shape_cast %2 : vector<8x1x768xf32> to vector<8x768xf32>
    %4 = arith.subf %1, %3 : vector<8x768xf32>
    %5 = vector.extract_strided_slice %0 {offsets = [0, 7, 0], sizes = [8, 1, 768], strides = [1, 1, 1]} : vector<8x8x768xf32> to vector<8x1x768xf32>
    %6 = vector.shape_cast %5 : vector<8x1x768xf32> to vector<8x768xf32>
    %7 = arith.subf %4, %6 : vector<8x768xf32>
    %8 = arith.truncf %7 : vector<8x768xf32> to vector<8x768xbf16>
    %c0_2 = arith.constant 0 : index
    %c0_3 = arith.constant 0 : index
    %9 = vector.load %arg2[%c0_2, %c0_3] : memref<768x128xbf16, #tpu.memory_space<vmem>>, vector<768x128xbf16>
    %cst_4 = arith.constant dense<0.000000e+00> : vector<8x128xf32>
    %10 = tpu.matmul %8, %9, %cst_4 {dimension_numbers = #tpu.dot_dimension_numbers<[1], [0], [0], [1], [0, 0, 1, 1], [], []>} : vector<8x768xbf16>, vector<768x128xbf16>, vector<8x128xf32> -> vector<8x128xf32>
    %c0_5 = arith.constant 0 : index
    %c0_6 = arith.constant 0 : index
    %11 = vector.load %arg3[%c0_5, %c0_6] : memref<1x128xf32, #tpu.memory_space<vmem>>, vector<1x128xf32>
    %12 = vector.broadcast %11 : vector<1x128xf32> to vector<8x128xf32>
    %13 = arith.addf %10, %12 : vector<8x128xf32>
    %c0_7 = arith.constant 0 : index
    %c0_8 = arith.constant 0 : index
    %14 = vector.load %arg4[%c0_7, %c0_8] : memref<8x128xf32, #tpu.memory_space<vmem>>, vector<8x128xf32>
    tpu.vector_store %arg4[%c0_7, %c0_8], %13 {strides = array<i32>} : memref<8x128xf32, #tpu.memory_space<vmem>>, vector<8x128xf32>,
    return
  }
  func.func @transform_0(%arg0: i32) -> (i32, i32, i32) {
    %c0_i32 = arith.constant 0 : i32
    %c0_i32_0 = arith.constant 0 : i32
    %c0_i32_1 = arith.constant 0 : i32
    return %arg0, %c0_i32, %c0_i32_0 : i32, i32, i32
  }
  func.func @transform_1(%arg0: i32) -> (i32, i32) {
    %c0_i32 = arith.constant 0 : i32
    %c0_i32_0 = arith.constant 0 : i32
    %c0_i32_1 = arith.constant 0 : i32
    return %c0_i32, %c0_i32_0 : i32, i32
  }
  func.func @transform_2(%arg0: i32) -> (i32, i32) {
    %c0_i32 = arith.constant 0 : i32
    %c0_i32_0 = arith.constant 0 : i32
    %c0_i32_1 = arith.constant 0 : i32
    return %c0_i32, %c0_i32_0 : i32, i32
  }
  func.func @transform_3(%arg0: i32) -> (i32, i32) {
    %c0_i32 = arith.constant 0 : i32
    %c0_i32_0 = arith.constant 0 : i32
    return %arg0, %c0_i32 : i32, i32
  }
}

</mosaic_0001>

<llo_original>
// kernel: tpu_custom_call.1
$region0: #{tpu_custom_call.1}
  #allocation0 [shape = 'u32[]', space=smem, size = 0x4, offset = 0x4, fixed_abs, tag = 'smem constant byte address 0x4 - core index']
  #allocation1 [shape = 'u32[72,128]{1,0:T(1,128)}', space=vmem, size = 0x9000, scoped, tag = 'internal scratch']
  %s0 = inlined_call_operand.hbm [shape: f32[8,8,768], index: 0, kind: input, shape index: {}]
  %s1 = inlined_call_operand.hbm [shape: bf16[768,128], index: 1, kind: input, shape index: {}]
  %s2 = inlined_call_operand.vmem [shape: f32[1,128], index: 2, kind: input, shape index: {}]
  %s3 = inlined_call_operand.hbm [shape: f32[8,128], index: 3, kind: output, shape index: {}]
  %s4 = sld [smem:[#allocation0]]
  $region30: #{tpu_custom_call.1} parent=0
    _
  %s6 = ssub.s32 1, %s4
  %s7 = scalar_select 0, %s6, %s4
  $region1: #{tpu_custom_call.1} parent=0
    #allocation2 [shape = 'u8[196608]{0}', space=vmem, size = 0x30000, scoped, tag = 'input window, operand 0, single buffered']
    #allocation3 [shape = 's32[1]{0}', space=sflag, size = 0x4, scoped, tag = 'scoped memory for tpu_custom_call.1']
    #allocation4 [shape = 's32[1]{0}', space=sflag, size = 0x4, scoped, tag = 'scoped memory for tpu_custom_call.1']
    #allocation5 [shape = 'u8[196608]{0}', space=vmem, size = 0x30000, scoped, tag = 'input window, operand 1, single buffered']
    #allocation6 [shape = 's32[1]{0}', space=sflag, size = 0x4, scoped, tag = 'scoped memory for tpu_custom_call.1']
    #allocation7 [shape = 'u8[4096]{0}', space=vmem, size = 0x1000, scoped, tag = 'output window, operand 0, single buffered']
    %8 = vsyncpa [#allocation3], 0
    %9 = vsyncpa [#allocation6], 0
    %10 = vsyncpa [#allocation4], 0
    // Predicated region
    $region2: #{tpu_custom_call.1} parent=1 // pred_check
      _
    $region3: #{tpu_custom_call.1} parent=1 // pred_check_branch
      %12 = sbr.rel (0) target = $region5
    $region4: #{tpu_custom_call.1} parent=1 // pred_region
      %14 = vsyncadd [#allocation3], 0
      %s15 = sshll.u32 %s0, 4
      %s16 = int_to_ptr.hbm [resolvable:$true] %s15
      %s17 = sshll.u32 [#allocation2], 4
      %s18 = int_to_ptr.vmem [resolvable:$true] %s17
      %23 = dma.hbm_to_vmem [thread:$0]  %s16, 6144, %s18, [#allocation3], 768, 768, 48
    $region5: #{tpu_custom_call.1} parent=1 // pred_fallthru
      _
    // Predicated region
    $region6: #{tpu_custom_call.1} parent=1 // pred_check
      _
    $region7: #{tpu_custom_call.1} parent=1 // pred_check_branch
      %25 = sbr.rel (0) target = $region9
    $region8: #{tpu_custom_call.1} parent=1 // pred_region
      %27 = vsyncadd [#allocation6], 0
      %s28 = sshll.u32 %s1, 4
      %s29 = int_to_ptr.hbm [resolvable:$true] %s28
      %s30 = sshll.u32 [#allocation5], 4
      %s31 = int_to_ptr.vmem [resolvable:$true] %s30
      %36 = dma.hbm_to_vmem [thread:$0]  %s29, 6144, %s31, [#allocation6], 64, 64, 4
    $region9: #{tpu_custom_call.1} parent=1 // pred_fallthru
      _
    // Predicated region
    $region10: #{tpu_custom_call.1} parent=1 // pred_check
      _
    $region11: #{tpu_custom_call.1} parent=1 // pred_check_branch
      %38 = sbr.rel (0) target = $region13
    $region12: #{tpu_custom_call.1} parent=1 // pred_region
      _
    $region13: #{tpu_custom_call.1} parent=1 // pred_fallthru
      _
    // Predicated region
    $region14: #{tpu_custom_call.1} parent=1 // pred_check
      _
    $region15: #{tpu_custom_call.1} parent=1 // pred_check_branch
      %40 = sbr.rel (0) target = $region17
    $region16: #{tpu_custom_call.1} parent=1 // pred_region
      %42 = dma.done [#allocation3], 6144
    $region17: #{tpu_custom_call.1} parent=1 // pred_fallthru
      _
    // Predicated region
    $region18: #{tpu_custom_call.1} parent=1 // pred_check
      _
    $region19: #{tpu_custom_call.1} parent=1 // pred_check_branch
      %44 = sbr.rel (0) target = $region21
    $region20: #{tpu_custom_call.1} parent=1 // pred_region
      %46 = dma.done [#allocation6], 6144
    $region21: #{tpu_custom_call.1} parent=1 // pred_fallthru
      _
    %v47 = vld [vmem:[#allocation2] sm:$0xff]
    %v48 = vld [vmem:[#allocation2 + $0x8] sm:$0xff]
    %v49 = vld [vmem:[#allocation2 + $0x10] sm:$0xff]
    %v50 = vld [vmem:[#allocation2 + $0x18] sm:$0xff]
    %v51 = vld [vmem:[#allocation2 + $0x20] sm:$0xff]
    %v52 = vld [vmem:[#allocation2 + $0x28] sm:$0xff]
    %v53 = vld [vmem:[#allocation2 + $0x30] sm:$0xff]
    %v54 = vld [vmem:[#allocation2 + $0x38] sm:$0xff]
    %v55 = vld [vmem:[#allocation2 + $0x40] sm:$0xff]
    %v56 = vld [vmem:[#allocation2 + $0x48] sm:$0xff]
    %v57 = vld [vmem:[#allocation2 + $0x50] sm:$0xff]
    %v58 = vld [vmem:[#allocation2 + $0x58] sm:$0xff]
    %v59 = vld [vmem:[#allocation2 + $0x60] sm:$0xff]
    %v60 = vld [vmem:[#allocation2 + $0x68] sm:$0xff]
    %v61 = vld [vmem:[#allocation2 + $0x70] sm:$0xff]
    %v62 = vld [vmem:[#allocation2 + $0x78] sm:$0xff]
    %v63 = vld [vmem:[#allocation2 + $0x80] sm:$0xff]
    %v64 = vld [vmem:[#allocation2 + $0x88] sm:$0xff]
    %v65 = vld [vmem:[#allocation2 + $0x90] sm:$0xff]
    %v66 = vld [vmem:[#allocation2 + $0x98] sm:$0xff]
    %v67 = vld [vmem:[#allocation2 + $0xa0] sm:$0xff]
    %v68 = vld [vmem:[#allocation2 + $0xa8] sm:$0xff]
    %v69 = vld [vmem:[#allocation2 + $0xb0] sm:$0xff]
    %v70 = vld [vmem:[#allocation2 + $0xb8] sm:$0xff]
    %v71 = vld [vmem:[#allocation2 + $0xc0] sm:$0xff]
    %v72 = vld [vmem:[#allocation2 + $0xc8] sm:$0xff]
    %v73 = vld [vmem:[#allocation2 + $0xd0] sm:$0xff]
    %v74 = vld [vmem:[#allocation2 + $0xd8] sm:$0xff]
    %v75 = vld [vmem:[#allocation2 + $0xe0] sm:$0xff]
    %v76 = vld [vmem:[#allocation2 + $0xe8] sm:$0xff]
    %v77 = vld [vmem:[#allocation2 + $0xf0] sm:$0xff]
    %v78 = vld [vmem:[#allocation2 + $0xf8] sm:$0xff]
    %v79 = vld [vmem:[#allocation2 + $0x100] sm:$0xff]
    %v80 = vld [vmem:[#allocation2 + $0x108] sm:$0xff]
    %v81 = vld [vmem:[#allocation2 + $0x110] sm:$0xff]
    %v82 = vld [vmem:[#allocation2 + $0x118] sm:$0xff]
    %v83 = vld [vmem:[#allocation2 + $0x120] sm:$0xff]
    %v84 = vld [vmem:[#allocation2 + $0x128] sm:$0xff]
    %v85 = vld [vmem:[#allocation2 + $0x130] sm:$0xff]
    %v86 = vld [vmem:[#allocation2 + $0x138] sm:$0xff]
    %v87 = vld [vmem:[#allocation2 + $0x140] sm:$0xff]
    %v88 = vld [vmem:[#allocation2 + $0x148] sm:$0xff]
    %v89 = vld [vmem:[#allocation2 + $0x150] sm:$0xff]
    %v90 = vld [vmem:[#allocation2 + $0x158] sm:$0xff]
    %v91 = vld [vmem:[#allocation2 + $0x160] sm:$0xff]
    %v92 = vld [vmem:[#allocation2 + $0x168] sm:$0xff]
    %v93 = vld [vmem:[#allocation2 + $0x170] sm:$0xff]
    %v94 = vld [vmem:[#allocation2 + $0x178] sm:$0xff]
    %v95 = vrot.slane %v47, 4
    %v96 = vadd.f32 %v47, %v95
    %v97 = vrot.slane %v96, 2
    %v98 = vadd.f32 %v96, %v97
    %v99 = vrot.slane %v98, 1
    %v100 = vadd.f32 %v98, %v99
    %v101 = vrot.slane %v48, 4
    %v102 = vadd.f32 %v48, %v101
    %v103 = vrot.slane %v102, 2
    %v104 = vadd.f32 %v102, %v103
    %v105 = vrot.slane %v104, 1
    %v106 = vadd.f32 %v104, %v105
    %v107 = vrot.slane %v49, 4
    %v108 = vadd.f32 %v49, %v107
    %v109 = vrot.slane %v108, 2
    %v110 = vadd.f32 %v108, %v109
    %v111 = vrot.slane %v110, 1
    %v112 = vadd.f32 %v110, %v111
    %v113 = vrot.slane %v50, 4
    %v114 = vadd.f32 %v50, %v113
    %v115 = vrot.slane %v114, 2
    %v116 = vadd.f32 %v114, %v115
    %v117 = vrot.slane %v116, 1
    %v118 = vadd.f32 %v116, %v117
    %v119 = vrot.slane %v51, 4
    %v120 = vadd.f32 %v51, %v119
    %v121 = vrot.slane %v120, 2
    %v122 = vadd.f32 %v120, %v121
    %v123 = vrot.slane %v122, 1
    %v124 = vadd.f32 %v122, %v123
    %v125 = vrot.slane %v52, 4
    %v126 = vadd.f32 %v52, %v125
    %v127 = vrot.slane %v126, 2
    %v128 = vadd.f32 %v126, %v127
    %v129 = vrot.slane %v128, 1
    %v130 = vadd.f32 %v128, %v129
    %v131 = vrot.slane %v53, 4
    %v132 = vadd.f32 %v53, %v131
    %v133 = vrot.slane %v132, 2
    %v134 = vadd.f32 %v132, %v133
    %v135 = vrot.slane %v134, 1
    %v136 = vadd.f32 %v134, %v135
    %v137 = vrot.slane %v54, 4
    %v138 = vadd.f32 %v54, %v137
    %v139 = vrot.slane %v138, 2
    %v140 = vadd.f32 %v138, %v139
    %v141 = vrot.slane %v140, 1
    %v142 = vadd.f32 %v140, %v141
    %v143 = vrot.slane %v55, 4
    %v144 = vadd.f32 %v55, %v143
    %v145 = vrot.slane %v144, 2
    %v146 = vadd.f32 %v144, %v145
    %v147 = vrot.slane %v146, 1
    %v148 = vadd.f32 %v146, %v147
    %v149 = vrot.slane %v56, 4
    %v150 = vadd.f32 %v56, %v149
    %v151 = vrot.slane %v150, 2
    %v152 = vadd.f32 %v150, %v151
    %v153 = vrot.slane %v152, 1
    %v154 = vadd.f32 %v152, %v153
    %v155 = vrot.slane %v57, 4
    %v156 = vadd.f32 %v57, %v155
    %v157 = vrot.slane %v156, 2
    %v158 = vadd.f32 %v156, %v157
    %v159 = vrot.slane %v158, 1
    %v160 = vadd.f32 %v158, %v159
    %v161 = vrot.slane %v58, 4
    %v162 = vadd.f32 %v58, %v161
    %v163 = vrot.slane %v162, 2
    %v164 = vadd.f32 %v162, %v163
    %v165 = vrot.slane %v164, 1
    %v166 = vadd.f32 %v164, %v165
    %v167 = vrot.slane %v59, 4
    %v168 = vadd.f32 %v59, %v167
    %v169 = vrot.slane %v168, 2
    %v170 = vadd.f32 %v168, %v169
    %v171 = vrot.slane %v170, 1
    %v172 = vadd.f32 %v170, %v171
    %v173 = vrot.slane %v60, 4
    %v174 = vadd.f32 %v60, %v173
    %v175 = vrot.slane %v174, 2
    %v176 = vadd.f32 %v174, %v175
    %v177 = vrot.slane %v176, 1
    %v178 = vadd.f32 %v176, %v177
    %v179 = vrot.slane %v61, 4
    %v180 = vadd.f32 %v61, %v179
    %v181 = vrot.slane %v180, 2
    %v182 = vadd.f32 %v180, %v181
    %v183 = vrot.slane %v182, 1
    %v184 = vadd.f32 %v182, %v183
    %v185 = vrot.slane %v62, 4
    %v186 = vadd.f32 %v62, %v185
    %v187 = vrot.slane %v186, 2
    %v188 = vadd.f32 %v186, %v187
    %v189 = vrot.slane %v188, 1
    %v190 = vadd.f32 %v188, %v189
    %v191 = vrot.slane %v63, 4
    %v192 = vadd.f32 %v63, %v191
    %v193 = vrot.slane %v192, 2
    %v194 = vadd.f32 %v192, %v193
    %v195 = vrot.slane %v194, 1
    %v196 = vadd.f32 %v194, %v195
    %v197 = vrot.slane %v64, 4
    %v198 = vadd.f32 %v64, %v197
    %v199 = vrot.slane %v198, 2
    %v200 = vadd.f32 %v198, %v199
    %v201 = vrot.slane %v200, 1
    %v202 = vadd.f32 %v200, %v201
    %v203 = vrot.slane %v65, 4
    %v204 = vadd.f32 %v65, %v203
    %v205 = vrot.slane %v204, 2
    %v206 = vadd.f32 %v204, %v205
    %v207 = vrot.slane %v206, 1
    %v208 = vadd.f32 %v206, %v207
    %v209 = vrot.slane %v66, 4
    %v210 = vadd.f32 %v66, %v209
    %v211 = vrot.slane %v210, 2
    %v212 = vadd.f32 %v210, %v211
    %v213 = vrot.slane %v212, 1
    %v214 = vadd.f32 %v212, %v213
    %v215 = vrot.slane %v67, 4
    %v216 = vadd.f32 %v67, %v215
    %v217 = vrot.slane %v216, 2
    %v218 = vadd.f32 %v216, %v217
    %v219 = vrot.slane %v218, 1
    %v220 = vadd.f32 %v218, %v219
    %v221 = vrot.slane %v68, 4
    %v222 = vadd.f32 %v68, %v221
    %v223 = vrot.slane %v222, 2
    %v224 = vadd.f32 %v222, %v223
    %v225 = vrot.slane %v224, 1
    %v226 = vadd.f32 %v224, %v225
    %v227 = vrot.slane %v69, 4
    %v228 = vadd.f32 %v69, %v227
    %v229 = vrot.slane %v228, 2
    %v230 = vadd.f32 %v228, %v229
    %v231 = vrot.slane %v230, 1
    %v232 = vadd.f32 %v230, %v231
    %v233 = vrot.slane %v70, 4
    %v234 = vadd.f32 %v70, %v233
    %v235 = vrot.slane %v234, 2
    %v236 = vadd.f32 %v234, %v235
    %v237 = vrot.slane %v236, 1
    %v238 = vadd.f32 %v236, %v237
    %v239 = vrot.slane %v71, 4
    %v240 = vadd.f32 %v71, %v239
    %v241 = vrot.slane %v240, 2
    %v242 = vadd.f32 %v240, %v241
    %v243 = vrot.slane %v242, 1
    %v244 = vadd.f32 %v242, %v243
    %v245 = vrot.slane %v72, 4
    %v246 = vadd.f32 %v72, %v245
    %v247 = vrot.slane %v246, 2
    %v248 = vadd.f32 %v246, %v247
    %v249 = vrot.slane %v248, 1
    %v250 = vadd.f32 %v248, %v249
    %v251 = vrot.slane %v73, 4
    %v252 = vadd.f32 %v73, %v251
    %v253 = vrot.slane %v252, 2
    %v254 = vadd.f32 %v252, %v253
    %v255 = vrot.slane %v254, 1
    %v256 = vadd.f32 %v254, %v255
    %v257 = vrot.slane %v74, 4
    %v258 = vadd.f32 %v74, %v257
    %v259 = vrot.slane %v258, 2
    %v260 = vadd.f32 %v258, %v259
    %v261 = vrot.slane %v260, 1
    %v262 = vadd.f32 %v260, %v261
    %v263 = vrot.slane %v75, 4
    %v264 = vadd.f32 %v75, %v263
    %v265 = vrot.slane %v264, 2
    %v266 = vadd.f32 %v264, %v265
    %v267 = vrot.slane %v266, 1
    %v268 = vadd.f32 %v266, %v267
    %v269 = vrot.slane %v76, 4
    %v270 = vadd.f32 %v76, %v269
    %v271 = vrot.slane %v270, 2
    %v272 = vadd.f32 %v270, %v271
    %v273 = vrot.slane %v272, 1
    %v274 = vadd.f32 %v272, %v273
    %v275 = vrot.slane %v77, 4
    %v276 = vadd.f32 %v77, %v275
    %v277 = vrot.slane %v276, 2
    %v278 = vadd.f32 %v276, %v277
    %v279 = vrot.slane %v278, 1
    %v280 = vadd.f32 %v278, %v279
    %v281 = vrot.slane %v78, 4
    %v282 = vadd.f32 %v78, %v281
    %v283 = vrot.slane %v282, 2
    %v284 = vadd.f32 %v282, %v283
    %v285 = vrot.slane %v284, 1
    %v286 = vadd.f32 %v284, %v285
    %v287 = vrot.slane %v79, 4
    %v288 = vadd.f32 %v79, %v287
    %v289 = vrot.slane %v288, 2
    %v290 = vadd.f32 %v288, %v289
    %v291 = vrot.slane %v290, 1
    %v292 = vadd.f32 %v290, %v291
    %v293 = vrot.slane %v80, 4
    %v294 = vadd.f32 %v80, %v293
    %v295 = vrot.slane %v294, 2
    %v296 = vadd.f32 %v294, %v295
    %v297 = vrot.slane %v296, 1
    %v298 = vadd.f32 %v296, %v297
    %v299 = vrot.slane %v81, 4
    %v300 = vadd.f32 %v81, %v299
    %v301 = vrot.slane %v300, 2
    %v302 = vadd.f32 %v300, %v301
    %v303 = vrot.slane %v302, 1
    %v304 = vadd.f32 %v302, %v303
    %v305 = vrot.slane %v82, 4
    %v306 = vadd.f32 %v82, %v305
    %v307 = vrot.slane %v306, 2
    %v308 = vadd.f32 %v306, %v307
    %v309 = vrot.slane %v308, 1
    %v310 = vadd.f32 %v308, %v309
    %v311 = vrot.slane %v83, 4
    %v312 = vadd.f32 %v83, %v311
    %v313 = vrot.slane %v312, 2
    %v314 = vadd.f32 %v312, %v313
    %v315 = vrot.slane %v314, 1
    %v316 = vadd.f32 %v314, %v315
    %v317 = vrot.slane %v84, 4
    %v318 = vadd.f32 %v84, %v317
    %v319 = vrot.slane %v318, 2
    %v320 = vadd.f32 %v318, %v319
    %v321 = vrot.slane %v320, 1
    %v322 = vadd.f32 %v320, %v321
    %v323 = vrot.slane %v85, 4
    %v324 = vadd.f32 %v85, %v323
    %v325 = vrot.slane %v324, 2
    %v326 = vadd.f32 %v324, %v325
    %v327 = vrot.slane %v326, 1
    %v328 = vadd.f32 %v326, %v327
    %v329 = vrot.slane %v86, 4
    %v330 = vadd.f32 %v86, %v329
    %v331 = vrot.slane %v330, 2
    %v332 = vadd.f32 %v330, %v331
    %v333 = vrot.slane %v332, 1
    %v334 = vadd.f32 %v332, %v333
    %v335 = vrot.slane %v87, 4
    %v336 = vadd.f32 %v87, %v335
    %v337 = vrot.slane %v336, 2
    %v338 = vadd.f32 %v336, %v337
    %v339 = vrot.slane %v338, 1
    %v340 = vadd.f32 %v338, %v339
    %v341 = vrot.slane %v88, 4
    %v342 = vadd.f32 %v88, %v341
    %v343 = vrot.slane %v342, 2
    %v344 = vadd.f32 %v342, %v343
    %v345 = vrot.slane %v344, 1
    %v346 = vadd.f32 %v344, %v345
    %v347 = vrot.slane %v89, 4
    %v348 = vadd.f32 %v89, %v347
    %v349 = vrot.slane %v348, 2
    %v350 = vadd.f32 %v348, %v349
    %v351 = vrot.slane %v350, 1
    %v352 = vadd.f32 %v350, %v351
    %v353 = vrot.slane %v90, 4
    %v354 = vadd.f32 %v90, %v353
    %v355 = vrot.slane %v354, 2
    %v356 = vadd.f32 %v354, %v355
    %v357 = vrot.slane %v356, 1
    %v358 = vadd.f32 %v356, %v357
    %v359 = vrot.slane %v91, 4
    %v360 = vadd.f32 %v91, %v359
    %v361 = vrot.slane %v360, 2
    %v362 = vadd.f32 %v360, %v361
    %v363 = vrot.slane %v362, 1
    %v364 = vadd.f32 %v362, %v363
    %v365 = vrot.slane %v92, 4
    %v366 = vadd.f32 %v92, %v365
    %v367 = vrot.slane %v366, 2
    %v368 = vadd.f32 %v366, %v367
    %v369 = vrot.slane %v368, 1
    %v370 = vadd.f32 %v368, %v369
    %v371 = vrot.slane %v93, 4
    %v372 = vadd.f32 %v93, %v371
    %v373 = vrot.slane %v372, 2
    %v374 = vadd.f32 %v372, %v373
    %v375 = vrot.slane %v374, 1
    %v376 = vadd.f32 %v374, %v375
    %v377 = vrot.slane %v94, 4
    %v378 = vadd.f32 %v94, %v377
    %v379 = vrot.slane %v378, 2
    %v380 = vadd.f32 %v378, %v379
    %v381 = vrot.slane %v380, 1
    %v382 = vadd.f32 %v380, %v381
    %v383 = vsub.f32 %v100, %v47
    %v384 = vsub.f32 %v106, %v48
    %v385 = vsub.f32 %v112, %v49
    %v386 = vsub.f32 %v118, %v50
    %v387 = vsub.f32 %v124, %v51
    %v388 = vsub.f32 %v130, %v52
    %v389 = vsub.f32 %v136, %v53
    %v390 = vsub.f32 %v142, %v54
    %v391 = vsub.f32 %v148, %v55
    %v392 = vsub.f32 %v154, %v56
    %v393 = vsub.f32 %v160, %v57
    %v394 = vsub.f32 %v166, %v58
    %v395 = vsub.f32 %v172, %v59
    %v396 = vsub.f32 %v178, %v60
    %v397 = vsub.f32 %v184, %v61
    %v398 = vsub.f32 %v190, %v62
    %v399 = vsub.f32 %v196, %v63
    %v400 = vsub.f32 %v202, %v64
    %v401 = vsub.f32 %v208, %v65
    %v402 = vsub.f32 %v214, %v66
    %v403 = vsub.f32 %v220, %v67
    %v404 = vsub.f32 %v226, %v68
    %v405 = vsub.f32 %v232, %v69
    %v406 = vsub.f32 %v238, %v70
    %v407 = vsub.f32 %v244, %v71
    %v408 = vsub.f32 %v250, %v72
    %v409 = vsub.f32 %v256, %v73
    %v410 = vsub.f32 %v262, %v74
    %v411 = vsub.f32 %v268, %v75
    %v412 = vsub.f32 %v274, %v76
    %v413 = vsub.f32 %v280, %v77
    %v414 = vsub.f32 %v286, %v78
    %v415 = vsub.f32 %v292, %v79
    %v416 = vsub.f32 %v298, %v80
    %v417 = vsub.f32 %v304, %v81
    %v418 = vsub.f32 %v310, %v82
    %v419 = vsub.f32 %v316, %v83
    %v420 = vsub.f32 %v322, %v84
    %v421 = vsub.f32 %v328, %v85
    %v422 = vsub.f32 %v334, %v86
    %v423 = vsub.f32 %v340, %v87
    %v424 = vsub.f32 %v346, %v88
    %v425 = vsub.f32 %v352, %v89
    %v426 = vsub.f32 %v358, %v90
    %v427 = vsub.f32 %v364, %v91
    %v428 = vsub.f32 %v370, %v92
    %v429 = vsub.f32 %v376, %v93
    %v430 = vsub.f32 %v382, %v94
    %v479 = vrot.slane %v47, 7
    %v480 = vrot.slane %v48, 7
    %v481 = vrot.slane %v49, 7
    %v482 = vrot.slane %v50, 7
    %v483 = vrot.slane %v51, 7
    %v484 = vrot.slane %v52, 7
    %v485 = vrot.slane %v53, 7
    %v486 = vrot.slane %v54, 7
    %v487 = vrot.slane %v55, 7
    %v488 = vrot.slane %v56, 7
    %v489 = vrot.slane %v57, 7
    %v490 = vrot.slane %v58, 7
    %v491 = vrot.slane %v59, 7
    %v492 = vrot.slane %v60, 7
    %v493 = vrot.slane %v61, 7
    %v494 = vrot.slane %v62, 7
    %v495 = vrot.slane %v63, 7
    %v496 = vrot.slane %v64, 7
    %v497 = vrot.slane %v65, 7
    %v498 = vrot.slane %v66, 7
    %v499 = vrot.slane %v67, 7
    %v500 = vrot.slane %v68, 7
    %v501 = vrot.slane %v69, 7
    %v502 = vrot.slane %v70, 7
    %v503 = vrot.slane %v71, 7
    %v504 = vrot.slane %v72, 7
    %v505 = vrot.slane %v73, 7
    %v506 = vrot.slane %v74, 7
    %v507 = vrot.slane %v75, 7
    %v508 = vrot.slane %v76, 7
    %v509 = vrot.slane %v77, 7
    %v510 = vrot.slane %v78, 7
    %v511 = vrot.slane %v79, 7
    %v512 = vrot.slane %v80, 7
    %v513 = vrot.slane %v81, 7
    %v514 = vrot.slane %v82, 7
    %v515 = vrot.slane %v83, 7
    %v516 = vrot.slane %v84, 7
    %v517 = vrot.slane %v85, 7
    %v518 = vrot.slane %v86, 7
    %v519 = vrot.slane %v87, 7
    %v520 = vrot.slane %v88, 7
    %v521 = vrot.slane %v89, 7
    %v522 = vrot.slane %v90, 7
    %v523 = vrot.slane %v91, 7
    %v524 = vrot.slane %v92, 7
    %v525 = vrot.slane %v93, 7
    %v526 = vrot.slane %v94, 7
    %v575 = vsub.f32 %v383, %v479
    %v576 = vsub.f32 %v384, %v480
    %v577 = vsub.f32 %v385, %v481
    %v578 = vsub.f32 %v386, %v482
    %v579 = vsub.f32 %v387, %v483
    %v580 = vsub.f32 %v388, %v484
    %v581 = vsub.f32 %v389, %v485
    %v582 = vsub.f32 %v390, %v486
    %v583 = vsub.f32 %v391, %v487
    %v584 = vsub.f32 %v392, %v488
    %v585 = vsub.f32 %v393, %v489
    %v586 = vsub.f32 %v394, %v490
    %v587 = vsub.f32 %v395, %v491
    %v588 = vsub.f32 %v396, %v492
    %v589 = vsub.f32 %v397, %v493
    %v590 = vsub.f32 %v398, %v494
    %v591 = vsub.f32 %v399, %v495
    %v592 = vsub.f32 %v400, %v496
    %v593 = vsub.f32 %v401, %v497
    %v594 = vsub.f32 %v402, %v498
    %v595 = vsub.f32 %v403, %v499
    %v596 = vsub.f32 %v404, %v500
    %v597 = vsub.f32 %v405, %v501
    %v598 = vsub.f32 %v406, %v502
    %v599 = vsub.f32 %v407, %v503
    %v600 = vsub.f32 %v408, %v504
    %v601 = vsub.f32 %v409, %v505
    %v602 = vsub.f32 %v410, %v506
    %v603 = vsub.f32 %v411, %v507
    %v604 = vsub.f32 %v412, %v508
    %v605 = vsub.f32 %v413, %v509
    %v606 = vsub.f32 %v414, %v510
    %v607 = vsub.f32 %v415, %v511
    %v608 = vsub.f32 %v416, %v512
    %v609 = vsub.f32 %v417, %v513
    %v610 = vsub.f32 %v418, %v514
    %v611 = vsub.f32 %v419, %v515
    %v612 = vsub.f32 %v420, %v516
    %v613 = vsub.f32 %v421, %v517
    %v614 = vsub.f32 %v422, %v518
    %v615 = vsub.f32 %v423, %v519
    %v616 = vsub.f32 %v424, %v520
    %v617 = vsub.f32 %v425, %v521
    %v618 = vsub.f32 %v426, %v522
    %v619 = vsub.f32 %v427, %v523
    %v620 = vsub.f32 %v428, %v524
    %v621 = vsub.f32 %v429, %v525
    %v622 = vsub.f32 %v430, %v526
    %v623 = vpack.c.bf16 %v575, %v575
    %v624 = vpack.c.bf16 %v576, %v576
    %v625 = vpack.c.bf16 %v577, %v577
    %v626 = vpack.c.bf16 %v578, %v578
    %v627 = vpack.c.bf16 %v579, %v579
    %v628 = vpack.c.bf16 %v580, %v580
    %v629 = vpack.c.bf16 %v581, %v581
    %v630 = vpack.c.bf16 %v582, %v582
    %v631 = vpack.c.bf16 %v583, %v583
    %v632 = vpack.c.bf16 %v584, %v584
    %v633 = vpack.c.bf16 %v585, %v585
    %v634 = vpack.c.bf16 %v586, %v586
    %v635 = vpack.c.bf16 %v587, %v587
    %v636 = vpack.c.bf16 %v588, %v588
    %v637 = vpack.c.bf16 %v589, %v589
    %v638 = vpack.c.bf16 %v590, %v590
    %v639 = vpack.c.bf16 %v591, %v591
    %v640 = vpack.c.bf16 %v592, %v592
    %v641 = vpack.c.bf16 %v593, %v593
    %v642 = vpack.c.bf16 %v594, %v594
    %v643 = vpack.c.bf16 %v595, %v595
    %v644 = vpack.c.bf16 %v596, %v596
    %v645 = vpack.c.bf16 %v597, %v597
    %v646 = vpack.c.bf16 %v598, %v598
    %v647 = vpack.c.bf16 %v599, %v599
    %v648 = vpack.c.bf16 %v600, %v600
    %v649 = vpack.c.bf16 %v601, %v601
    %v650 = vpack.c.bf16 %v602, %v602
    %v651 = vpack.c.bf16 %v603, %v603
    %v652 = vpack.c.bf16 %v604, %v604
    %v653 = vpack.c.bf16 %v605, %v605
    %v654 = vpack.c.bf16 %v606, %v606
    %v655 = vpack.c.bf16 %v607, %v607
    %v656 = vpack.c.bf16 %v608, %v608
    %v657 = vpack.c.bf16 %v609, %v609
    %v658 = vpack.c.bf16 %v610, %v610
    %v659 = vpack.c.bf16 %v611, %v611
    %v660 = vpack.c.bf16 %v612, %v612
    %v661 = vpack.c.bf16 %v613, %v613
    %v662 = vpack.c.bf16 %v614, %v614
    %v663 = vpack.c.bf16 %v615, %v615
    %v664 = vpack.c.bf16 %v616, %v616
    %v665 = vpack.c.bf16 %v617, %v617
    %v666 = vpack.c.bf16 %v618, %v618
    %v667 = vpack.c.bf16 %v619, %v619
    %v668 = vpack.c.bf16 %v620, %v620
    %v669 = vpack.c.bf16 %v621, %v621
    %v670 = vpack.c.bf16 %v622, %v622
    %v671 = vld [vmem:[#allocation5] sm:$0xf]
    %v672 = vld [vmem:[#allocation5 + $0x4] sm:$0xf]
    %v673 = vld [vmem:[#allocation5 + $0x8] sm:$0xf]
    %v674 = vld [vmem:[#allocation5 + $0xc] sm:$0xf]
    %v675 = vld [vmem:[#allocation5 + $0x10] sm:$0xf]
    %v676 = vld [vmem:[#allocation5 + $0x14] sm:$0xf]
    %v677 = vld [vmem:[#allocation5 + $0x18] sm:$0xf]
    %v678 = vld [vmem:[#allocation5 + $0x1c] sm:$0xf]
    %v679 = vld [vmem:[#allocation5 + $0x20] sm:$0xf]
    %v680 = vld [vmem:[#allocation5 + $0x24] sm:$0xf]
    %v681 = vld [vmem:[#allocation5 + $0x28] sm:$0xf]
    %v682 = vld [vmem:[#allocation5 + $0x2c] sm:$0xf]
    %v683 = vld [vmem:[#allocation5 + $0x30] sm:$0xf]
    %v684 = vld [vmem:[#allocation5 + $0x34] sm:$0xf]
    %v685 = vld [vmem:[#allocation5 + $0x38] sm:$0xf]
    %v686 = vld [vmem:[#allocation5 + $0x3c] sm:$0xf]
    %v687 = vld [vmem:[#allocation5 + $0x40] sm:$0xf]
    %v688 = vld [vmem:[#allocation5 + $0x44] sm:$0xf]
    %v689 = vld [vmem:[#allocation5 + $0x48] sm:$0xf]
    %v690 = vld [vmem:[#allocation5 + $0x4c] sm:$0xf]
    %v691 = vld [vmem:[#allocation5 + $0x50] sm:$0xf]
    %v692 = vld [vmem:[#allocation5 + $0x54] sm:$0xf]
    %v693 = vld [vmem:[#allocation5 + $0x58] sm:$0xf]
    %v694 = vld [vmem:[#allocation5 + $0x5c] sm:$0xf]
    %v695 = vld [vmem:[#allocation5 + $0x60] sm:$0xf]
    %v696 = vld [vmem:[#allocation5 + $0x64] sm:$0xf]
    %v697 = vld [vmem:[#allocation5 + $0x68] sm:$0xf]
    %v698 = vld [vmem:[#allocation5 + $0x6c] sm:$0xf]
    %v699 = vld [vmem:[#allocation5 + $0x70] sm:$0xf]
    %v700 = vld [vmem:[#allocation5 + $0x74] sm:$0xf]
    %v701 = vld [vmem:[#allocation5 + $0x78] sm:$0xf]
    %v702 = vld [vmem:[#allocation5 + $0x7c] sm:$0xf]
    %v703 = vld [vmem:[#allocation5 + $0x80] sm:$0xf]
    %v704 = vld [vmem:[#allocation5 + $0x84] sm:$0xf]
    %v705 = vld [vmem:[#allocation5 + $0x88] sm:$0xf]
    %v706 = vld [vmem:[#allocation5 + $0x8c] sm:$0xf]
    %v707 = vld [vmem:[#allocation5 + $0x90] sm:$0xf]
    %v708 = vld [vmem:[#allocation5 + $0x94] sm:$0xf]
    %v709 = vld [vmem:[#allocation5 + $0x98] sm:$0xf]
    %v710 = vld [vmem:[#allocation5 + $0x9c] sm:$0xf]
    %v711 = vld [vmem:[#allocation5 + $0xa0] sm:$0xf]
    %v712 = vld [vmem:[#allocation5 + $0xa4] sm:$0xf]
    %v713 = vld [vmem:[#allocation5 + $0xa8] sm:$0xf]
    %v714 = vld [vmem:[#allocation5 + $0xac] sm:$0xf]
    %v715 = vld [vmem:[#allocation5 + $0xb0] sm:$0xf]
    %v716 = vld [vmem:[#allocation5 + $0xb4] sm:$0xf]
    %v717 = vld [vmem:[#allocation5 + $0xb8] sm:$0xf]
    %v718 = vld [vmem:[#allocation5 + $0xbc] sm:$0xf]
    %v719 = vld [vmem:[#allocation5 + $0xc0] sm:$0xf]
    %v720 = vld [vmem:[#allocation5 + $0xc4] sm:$0xf]
    %v721 = vld [vmem:[#allocation5 + $0xc8] sm:$0xf]
    %v722 = vld [vmem:[#allocation5 + $0xcc] sm:$0xf]
    %v723 = vld [vmem:[#allocation5 + $0xd0] sm:$0xf]
    %v724 = vld [vmem:[#allocation5 + $0xd4] sm:$0xf]
    %v725 = vld [vmem:[#allocation5 + $0xd8] sm:$0xf]
    %v726 = vld [vmem:[#allocation5 + $0xdc] sm:$0xf]
    %v727 = vld [vmem:[#allocation5 + $0xe0] sm:$0xf]
    %v728 = vld [vmem:[#allocation5 + $0xe4] sm:$0xf]
    %v729 = vld [vmem:[#allocation5 + $0xe8] sm:$0xf]
    %v730 = vld [vmem:[#allocation5 + $0xec] sm:$0xf]
    %v731 = vld [vmem:[#allocation5 + $0xf0] sm:$0xf]
    %v732 = vld [vmem:[#allocation5 + $0xf4] sm:$0xf]
    %v733 = vld [vmem:[#allocation5 + $0xf8] sm:$0xf]
    %v734 = vld [vmem:[#allocation5 + $0xfc] sm:$0xf]
    %v735 = vld [vmem:[#allocation5 + $0x100] sm:$0xf]
    %v736 = vld [vmem:[#allocation5 + $0x104] sm:$0xf]
    %v737 = vld [vmem:[#allocation5 + $0x108] sm:$0xf]
    %v738 = vld [vmem:[#allocation5 + $0x10c] sm:$0xf]
    %v739 = vld [vmem:[#allocation5 + $0x110] sm:$0xf]
    %v740 = vld [vmem:[#allocation5 + $0x114] sm:$0xf]
    %v741 = vld [vmem:[#allocation5 + $0x118] sm:$0xf]
    %v742 = vld [vmem:[#allocation5 + $0x11c] sm:$0xf]
    %v743 = vld [vmem:[#allocation5 + $0x120] sm:$0xf]
    %v744 = vld [vmem:[#allocation5 + $0x124] sm:$0xf]
    %v745 = vld [vmem:[#allocation5 + $0x128] sm:$0xf]
    %v746 = vld [vmem:[#allocation5 + $0x12c] sm:$0xf]
    %v747 = vld [vmem:[#allocation5 + $0x130] sm:$0xf]
    %v748 = vld [vmem:[#allocation5 + $0x134] sm:$0xf]
    %v749 = vld [vmem:[#allocation5 + $0x138] sm:$0xf]
    %v750 = vld [vmem:[#allocation5 + $0x13c] sm:$0xf]
    %v751 = vld [vmem:[#allocation5 + $0x140] sm:$0xf]
    %v752 = vld [vmem:[#allocation5 + $0x144] sm:$0xf]
    %v753 = vld [vmem:[#allocation5 + $0x148] sm:$0xf]
    %v754 = vld [vmem:[#allocation5 + $0x14c] sm:$0xf]
    %v755 = vld [vmem:[#allocation5 + $0x150] sm:$0xf]
    %v756 = vld [vmem:[#allocation5 + $0x154] sm:$0xf]
    %v757 = vld [vmem:[#allocation5 + $0x158] sm:$0xf]
    %v758 = vld [vmem:[#allocation5 + $0x15c] sm:$0xf]
    %v759 = vld [vmem:[#allocation5 + $0x160] sm:$0xf]
    %v760 = vld [vmem:[#allocation5 + $0x164] sm:$0xf]
    %v761 = vld [vmem:[#allocation5 + $0x168] sm:$0xf]
    %v762 = vld [vmem:[#allocation5 + $0x16c] sm:$0xf]
    %v763 = vld [vmem:[#allocation5 + $0x170] sm:$0xf]
    %v764 = vld [vmem:[#allocation5 + $0x174] sm:$0xf]
    %v765 = vld [vmem:[#allocation5 + $0x178] sm:$0xf]
    %v766 = vld [vmem:[#allocation5 + $0x17c] sm:$0xf]
    %v767 = vld [vmem:[%s2] sm:$0x1]
    %v769 = vperm.slane %v767, 0
    %v819 = vunpack.c.l.b16 %v623
    %v820 = vunpack.c.l.b16 %v624
    %v821 = vunpack.c.l.b16 %v625
    %v822 = vunpack.c.l.b16 %v626
    %v823 = vunpack.c.l.b16 %v627
    %v824 = vunpack.c.l.b16 %v628
    %v825 = vunpack.c.l.b16 %v629
    %v826 = vunpack.c.l.b16 %v630
    %v827 = vunpack.c.l.b16 %v631
    %v828 = vunpack.c.l.b16 %v632
    %v829 = vunpack.c.l.b16 %v633
    %v830 = vunpack.c.l.b16 %v634
    %v831 = vunpack.c.l.b16 %v635
    %v832 = vunpack.c.l.b16 %v636
    %v833 = vunpack.c.l.b16 %v637
    %v834 = vunpack.c.l.b16 %v638
    %v835 = vunpack.c.l.b16 %v639
    %v836 = vunpack.c.l.b16 %v640
    %v837 = vunpack.c.l.b16 %v641
    %v838 = vunpack.c.l.b16 %v642
    %v839 = vunpack.c.l.b16 %v643
    %v840 = vunpack.c.l.b16 %v644
    %v841 = vunpack.c.l.b16 %v645
    %v842 = vunpack.c.l.b16 %v646
    %v843 = vunpack.c.l.b16 %v647
    %v844 = vunpack.c.l.b16 %v648
    %v845 = vunpack.c.l.b16 %v649
    %v846 = vunpack.c.l.b16 %v650
    %v847 = vunpack.c.l.b16 %v651
    %v848 = vunpack.c.l.b16 %v652
    %v849 = vunpack.c.l.b16 %v653
    %v850 = vunpack.c.l.b16 %v654
    %v851 = vunpack.c.l.b16 %v655
    %v852 = vunpack.c.l.b16 %v656
    %v853 = vunpack.c.l.b16 %v657
    %v854 = vunpack.c.l.b16 %v658
    %v855 = vunpack.c.l.b16 %v659
    %v856 = vunpack.c.l.b16 %v660
    %v857 = vunpack.c.l.b16 %v661
    %v858 = vunpack.c.l.b16 %v662
    %v859 = vunpack.c.l.b16 %v663
    %v860 = vunpack.c.l.b16 %v664
    %v861 = vunpack.c.l.b16 %v665
    %v862 = vunpack.c.l.b16 %v666
    %v863 = vunpack.c.l.b16 %v667
    %v864 = vunpack.c.l.b16 %v668
    %v865 = vunpack.c.l.b16 %v669
    %v866 = vunpack.c.l.b16 %v670
    %v867 = vrot.slane %v825, 7
    %vm868 = vcmask 1041409
    %v869 = vsel %vm868, %v867, %v819
    %v870 = vrot.slane %v831, 6
    %vm871 = vcmask 1042434
    %v872 = vsel %vm871, %v870, %v869
    %v873 = vrot.slane %v837, 5
    %vm874 = vcmask 1043459
    %v875 = vsel %vm874, %v873, %v872
    %v876 = vrot.slane %v843, 4
    %vm877 = vcmask 1044484
    %v878 = vsel %vm877, %v876, %v875
    %v879 = vrot.slane %v849, 3
    %vm880 = vcmask 1045509
    %v881 = vsel %vm880, %v879, %v878
    %v882 = vrot.slane %v855, 2
    %vm883 = vcmask 1046534
    %v884 = vsel %vm883, %v882, %v881
    %v885 = vrot.slane %v861, 1
    %vm886 = vcmask 1047559
    %v887 = vsel %vm886, %v885, %v884
    %v888 = vrot.slane %v826, 7
    %v889 = vsel %vm868, %v888, %v820
    %v890 = vrot.slane %v832, 6
    %v891 = vsel %vm871, %v890, %v889
    %v892 = vrot.slane %v838, 5
    %v893 = vsel %vm874, %v892, %v891
    %v894 = vrot.slane %v844, 4
    %v895 = vsel %vm877, %v894, %v893
    %v896 = vrot.slane %v850, 3
    %v897 = vsel %vm880, %v896, %v895
    %v898 = vrot.slane %v856, 2
    %v899 = vsel %vm883, %v898, %v897
    %v900 = vrot.slane %v862, 1
    %v901 = vsel %vm886, %v900, %v899
    %v902 = vrot.slane %v827, 7
    %v903 = vsel %vm868, %v902, %v821
    %v904 = vrot.slane %v833, 6
    %v905 = vsel %vm871, %v904, %v903
    %v906 = vrot.slane %v839, 5
    %v907 = vsel %vm874, %v906, %v905
    %v908 = vrot.slane %v845, 4
    %v909 = vsel %vm877, %v908, %v907
    %v910 = vrot.slane %v851, 3
    %v911 = vsel %vm880, %v910, %v909
    %v912 = vrot.slane %v857, 2
    %v913 = vsel %vm883, %v912, %v911
    %v914 = vrot.slane %v863, 1
    %v915 = vsel %vm886, %v914, %v913
    %v916 = vrot.slane %v828, 7
    %v917 = vsel %vm868, %v916, %v822
    %v918 = vrot.slane %v834, 6
    %v919 = vsel %vm871, %v918, %v917
    %v920 = vrot.slane %v840, 5
    %v921 = vsel %vm874, %v920, %v919
    %v922 = vrot.slane %v846, 4
    %v923 = vsel %vm877, %v922, %v921
    %v924 = vrot.slane %v852, 3
    %v925 = vsel %vm880, %v924, %v923
    %v926 = vrot.slane %v858, 2
    %v927 = vsel %vm883, %v926, %v925
    %v928 = vrot.slane %v864, 1
    %v929 = vsel %vm886, %v928, %v927
    %v930 = vrot.slane %v829, 7
    %v931 = vsel %vm868, %v930, %v823
    %v932 = vrot.slane %v835, 6
    %v933 = vsel %vm871, %v932, %v931
    %v934 = vrot.slane %v841, 5
    %v935 = vsel %vm874, %v934, %v933
    %v936 = vrot.slane %v847, 4
    %v937 = vsel %vm877, %v936, %v935
    %v938 = vrot.slane %v853, 3
    %v939 = vsel %vm880, %v938, %v937
    %v940 = vrot.slane %v859, 2
    %v941 = vsel %vm883, %v940, %v939
    %v942 = vrot.slane %v865, 1
    %v943 = vsel %vm886, %v942, %v941
    %v944 = vrot.slane %v830, 7
    %v945 = vsel %vm868, %v944, %v824
    %v946 = vrot.slane %v836, 6
    %v947 = vsel %vm871, %v946, %v945
    %v948 = vrot.slane %v842, 5
    %v949 = vsel %vm874, %v948, %v947
    %v950 = vrot.slane %v848, 4
    %v951 = vsel %vm877, %v950, %v949
    %v952 = vrot.slane %v854, 3
    %v953 = vsel %vm880, %v952, %v951
    %v954 = vrot.slane %v860, 2
    %v955 = vsel %vm883, %v954, %v953
    %v956 = vrot.slane %v866, 1
    %v957 = vsel %vm886, %v956, %v955
    %v958 = vpack.c.b16 %v887, %v887
    %v959 = vpack.c.b16 %v901, %v901
    %v960 = vpack.c.b16 %v915, %v915
    %v961 = vpack.c.b16 %v929, %v929
    %v962 = vpack.c.b16 %v943, %v943
    %v963 = vpack.c.b16 %v957, %v957
    %v1066 = vunpack.c.l.b16 %v671
    %v1067 = vunpack.c.l.b16 %v672
    %v1068 = vunpack.c.l.b16 %v673
    %v1069 = vunpack.c.l.b16 %v674
    %v1070 = vunpack.c.l.b16 %v675
    %v1071 = vunpack.c.l.b16 %v676
    %v1072 = vunpack.c.l.b16 %v677
    %v1073 = vunpack.c.l.b16 %v678
    %v1074 = vunpack.c.l.b16 %v679
    %v1075 = vunpack.c.l.b16 %v680
    %v1076 = vunpack.c.l.b16 %v681
    %v1077 = vunpack.c.l.b16 %v682
    %v1078 = vunpack.c.l.b16 %v683
    %v1079 = vunpack.c.l.b16 %v684
    %v1080 = vunpack.c.l.b16 %v685
    %v1081 = vunpack.c.l.b16 %v686
    %v1082 = vunpack.c.l.b16 %v687
    %v1083 = vunpack.c.l.b16 %v688
    %v1084 = vunpack.c.l.b16 %v689
    %v1085 = vunpack.c.l.b16 %v690
    %v1086 = vunpack.c.l.b16 %v691
    %v1087 = vunpack.c.l.b16 %v692
    %v1088 = vunpack.c.l.b16 %v693
    %v1089 = vunpack.c.l.b16 %v694
    %v1090 = vunpack.c.l.b16 %v695
    %v1091 = vunpack.c.l.b16 %v696
    %v1092 = vunpack.c.l.b16 %v697
    %v1093 = vunpack.c.l.b16 %v698
    %v1094 = vunpack.c.l.b16 %v699
    %v1095 = vunpack.c.l.b16 %v700
    %v1096 = vunpack.c.l.b16 %v701
    %v1097 = vunpack.c.l.b16 %v702
    %v1098 = vunpack.c.l.b16 %v703
    %v1099 = vunpack.c.l.b16 %v704
    %v1100 = vunpack.c.l.b16 %v705
    %v1101 = vunpack.c.l.b16 %v706
    %v1102 = vunpack.c.l.b16 %v707
    %v1103 = vunpack.c.l.b16 %v708
    %v1104 = vunpack.c.l.b16 %v709
    %v1105 = vunpack.c.l.b16 %v710
    %v1106 = vunpack.c.l.b16 %v711
    %v1107 = vunpack.c.l.b16 %v712
    %v1108 = vunpack.c.l.b16 %v713
    %v1109 = vunpack.c.l.b16 %v714
    %v1110 = vunpack.c.l.b16 %v715
    %v1111 = vunpack.c.l.b16 %v716
    %v1112 = vunpack.c.l.b16 %v717
    %v1113 = vunpack.c.l.b16 %v718
    %v1114 = vunpack.c.l.b16 %v719
    %v1115 = vunpack.c.l.b16 %v720
    %v1116 = vunpack.c.l.b16 %v721
    %v1117 = vunpack.c.l.b16 %v722
    %v1118 = vunpack.c.l.b16 %v723
    %v1119 = vunpack.c.l.b16 %v724
    %v1120 = vunpack.c.l.b16 %v725
    %v1121 = vunpack.c.l.b16 %v726
    %v1122 = vunpack.c.l.b16 %v727
    %v1123 = vunpack.c.l.b16 %v728
    %v1124 = vunpack.c.l.b16 %v729
    %v1125 = vunpack.c.l.b16 %v730
    %v1126 = vunpack.c.l.b16 %v731
    %v1127 = vunpack.c.l.b16 %v732
    %v1128 = vunpack.c.l.b16 %v733
    %v1129 = vunpack.c.l.b16 %v734
    %v1130 = vunpack.c.l.b16 %v735
    %v1131 = vunpack.c.l.b16 %v736
    %v1132 = vunpack.c.l.b16 %v737
    %v1133 = vunpack.c.l.b16 %v738
    %v1134 = vunpack.c.l.b16 %v739
    %v1135 = vunpack.c.l.b16 %v740
    %v1136 = vunpack.c.l.b16 %v741
    %v1137 = vunpack.c.l.b16 %v742
    %v1138 = vunpack.c.l.b16 %v743
    %v1139 = vunpack.c.l.b16 %v744
    %v1140 = vunpack.c.l.b16 %v745
    %v1141 = vunpack.c.l.b16 %v746
    %v1142 = vunpack.c.l.b16 %v747
    %v1143 = vunpack.c.l.b16 %v748
    %v1144 = vunpack.c.l.b16 %v749
    %v1145 = vunpack.c.l.b16 %v750
    %v1146 = vunpack.c.l.b16 %v751
    %v1147 = vunpack.c.l.b16 %v752
    %v1148 = vunpack.c.l.b16 %v753
    %v1149 = vunpack.c.l.b16 %v754
    %v1150 = vunpack.c.l.b16 %v755
    %v1151 = vunpack.c.l.b16 %v756
    %v1152 = vunpack.c.l.b16 %v757
    %v1153 = vunpack.c.l.b16 %v758
    %v1154 = vunpack.c.l.b16 %v759
    %v1155 = vunpack.c.l.b16 %v760
    %v1156 = vunpack.c.l.b16 %v761
    %v1157 = vunpack.c.l.b16 %v762
    %v1158 = vunpack.c.l.b16 %v763
    %v1159 = vunpack.c.l.b16 %v764
    %v1160 = vunpack.c.l.b16 %v765
    %v1161 = vunpack.c.l.b16 %v766
    %v1162 = vpack.c.b16 %v1067, %v1066
    %v1163 = vpack.c.b16 %v1069, %v1068
    %v1164 = vpack.c.b16 %v1071, %v1070
    %v1165 = vpack.c.b16 %v1073, %v1072
    %v1166 = vpack.c.b16 %v1075, %v1074
    %v1167 = vpack.c.b16 %v1077, %v1076
    %v1168 = vpack.c.b16 %v1079, %v1078
    %v1169 = vpack.c.b16 %v1081, %v1080
    %v1170 = vpack.c.b16 %v1083, %v1082
    %v1171 = vpack.c.b16 %v1085, %v1084
    %v1172 = vpack.c.b16 %v1087, %v1086
    %v1173 = vpack.c.b16 %v1089, %v1088
    %v1174 = vpack.c.b16 %v1091, %v1090
    %v1175 = vpack.c.b16 %v1093, %v1092
    %v1176 = vpack.c.b16 %v1095, %v1094
    %v1177 = vpack.c.b16 %v1097, %v1096
    %v1178 = vpack.c.b16 %v1099, %v1098
    %v1179 = vpack.c.b16 %v1101, %v1100
    %v1180 = vpack.c.b16 %v1103, %v1102
    %v1181 = vpack.c.b16 %v1105, %v1104
    %v1182 = vpack.c.b16 %v1107, %v1106
    %v1183 = vpack.c.b16 %v1109, %v1108
    %v1184 = vpack.c.b16 %v1111, %v1110
    %v1185 = vpack.c.b16 %v1113, %v1112
    %v1186 = vpack.c.b16 %v1115, %v1114
    %v1187 = vpack.c.b16 %v1117, %v1116
    %v1188 = vpack.c.b16 %v1119, %v1118
    %v1189 = vpack.c.b16 %v1121, %v1120
    %v1190 = vpack.c.b16 %v1123, %v1122
    %v1191 = vpack.c.b16 %v1125, %v1124
    %v1192 = vpack.c.b16 %v1127, %v1126
    %v1193 = vpack.c.b16 %v1129, %v1128
    %v1194 = vpack.c.b16 %v1131, %v1130
    %v1195 = vpack.c.b16 %v1133, %v1132
    %v1196 = vpack.c.b16 %v1135, %v1134
    %v1197 = vpack.c.b16 %v1137, %v1136
    %v1198 = vpack.c.b16 %v1139, %v1138
    %v1199 = vpack.c.b16 %v1141, %v1140
    %v1200 = vpack.c.b16 %v1143, %v1142
    %v1201 = vpack.c.b16 %v1145, %v1144
    %v1202 = vpack.c.b16 %v1147, %v1146
    %v1203 = vpack.c.b16 %v1149, %v1148
    %v1204 = vpack.c.b16 %v1151, %v1150
    %v1205 = vpack.c.b16 %v1153, %v1152
    %v1206 = vpack.c.b16 %v1155, %v1154
    %v1207 = vpack.c.b16 %v1157, %v1156
    %v1208 = vpack.c.b16 %v1159, %v1158
    %v1209 = vpack.c.b16 %v1161, %v1160
    %1258 = vmatpush.bf16.msra.mxu0 %v1169
    %1259 = vmatpush.bf16.msra.mxu0 %v1168
    %1260 = vmatpush.bf16.msra.mxu0 %v1167
    %1261 = vmatpush.bf16.msra.mxu0 %v1166
    %1262 = vmatpush.bf16.msra.mxu0 %v1165
    %1263 = vmatpush.bf16.msra.mxu0 %v1164
    %1264 = vmatpush.bf16.msra.mxu0 %v1163
    %1265 = vmatpush.bf16.msra.mxu0 %v1162
    %1266 = vmatmul.bf16.gmra.mxu0 %v958
    %v1267 = vpop.f32.mrf.mxu0
    %v1268 = vadd.f32 %v769, %v1267
    %v1269 = vpop.f32.mrf.mxu0
    %1270 = vdwg.mxu0
    %1271 = vmatpush.bf16.msra.mxu0 %v1177
    %1272 = vmatpush.bf16.msra.mxu0 %v1176
    %1273 = vmatpush.bf16.msra.mxu0 %v1175
    %1274 = vmatpush.bf16.msra.mxu0 %v1174
    %1275 = vmatpush.bf16.msra.mxu0 %v1173
    %1276 = vmatpush.bf16.msra.mxu0 %v1172
    %1277 = vmatpush.bf16.msra.mxu0 %v1171
    %1278 = vmatpush.bf16.msra.mxu0 %v1170
    %1279 = vmatmul.bf16.gmra.mxu0 %v959
    %v1280 = vpop.f32.mrf.mxu0
    %v1281 = vadd.f32 %v1268, %v1280
    %v1282 = vpop.f32.mrf.mxu0
    %1283 = vdwg.mxu0
    %1284 = vmatpush.bf16.msra.mxu0 %v1185
    %1285 = vmatpush.bf16.msra.mxu0 %v1184
    %1286 = vmatpush.bf16.msra.mxu0 %v1183
    %1287 = vmatpush.bf16.msra.mxu0 %v1182
    %1288 = vmatpush.bf16.msra.mxu0 %v1181
    %1289 = vmatpush.bf16.msra.mxu0 %v1180
    %1290 = vmatpush.bf16.msra.mxu0 %v1179
    %1291 = vmatpush.bf16.msra.mxu0 %v1178
    %1292 = vmatmul.bf16.gmra.mxu0 %v960
    %v1293 = vpop.f32.mrf.mxu0
    %v1294 = vadd.f32 %v1281, %v1293
    %v1295 = vpop.f32.mrf.mxu0
    %1296 = vdwg.mxu0
    %1297 = vmatpush.bf16.msra.mxu0 %v1193
    %1298 = vmatpush.bf16.msra.mxu0 %v1192
    %1299 = vmatpush.bf16.msra.mxu0 %v1191
    %1300 = vmatpush.bf16.msra.mxu0 %v1190
    %1301 = vmatpush.bf16.msra.mxu0 %v1189
    %1302 = vmatpush.bf16.msra.mxu0 %v1188
    %1303 = vmatpush.bf16.msra.mxu0 %v1187
    %1304 = vmatpush.bf16.msra.mxu0 %v1186
    %1305 = vmatmul.bf16.gmra.mxu0 %v961
    %v1306 = vpop.f32.mrf.mxu0
    %v1307 = vadd.f32 %v1294, %v1306
    %v1308 = vpop.f32.mrf.mxu0
    %1309 = vdwg.mxu0
    %1310 = vmatpush.bf16.msra.mxu0 %v1201
    %1311 = vmatpush.bf16.msra.mxu0 %v1200
    %1312 = vmatpush.bf16.msra.mxu0 %v1199
    %1313 = vmatpush.bf16.msra.mxu0 %v1198
    %1314 = vmatpush.bf16.msra.mxu0 %v1197
    %1315 = vmatpush.bf16.msra.mxu0 %v1196
    %1316 = vmatpush.bf16.msra.mxu0 %v1195
    %1317 = vmatpush.bf16.msra.mxu0 %v1194
    %1318 = vmatmul.bf16.gmra.mxu0 %v962
    %v1319 = vpop.f32.mrf.mxu0
    %v1320 = vadd.f32 %v1307, %v1319
    %v1321 = vpop.f32.mrf.mxu0
    %1322 = vdwg.mxu0
    %1323 = vmatpush.bf16.msra.mxu0 %v1209
    %1324 = vmatpush.bf16.msra.mxu0 %v1208
    %1325 = vmatpush.bf16.msra.mxu0 %v1207
    %1326 = vmatpush.bf16.msra.mxu0 %v1206
    %1327 = vmatpush.bf16.msra.mxu0 %v1205
    %1328 = vmatpush.bf16.msra.mxu0 %v1204
    %1329 = vmatpush.bf16.msra.mxu0 %v1203
    %1330 = vmatpush.bf16.msra.mxu0 %v1202
    %1331 = vmatmul.bf16.gmra.mxu0 %v963
    %v1332 = vpop.f32.mrf.mxu0
    %v1333 = vadd.f32 %v1320, %v1332
    %v1334 = vpop.f32.mrf.mxu0
    %1335 = vdwg.mxu0
    %1336 = vst [vmem:[#allocation7] sm:$0xff] %v1333
    // Predicated region
    $region22: #{tpu_custom_call.1} parent=1 // pred_check
      _
    $region23: #{tpu_custom_call.1} parent=1 // pred_check_branch
      %1338 = sbr.rel (0) target = $region25
    $region24: #{tpu_custom_call.1} parent=1 // pred_region
      %1340 = vsyncadd [#allocation4], 0
      %s1342 = sshll.u32 [#allocation7], 4
      %s1343 = int_to_ptr.vmem [resolvable:$true] %s1342
      %s1344 = sshll.u32 %s3, 4
      %s1345 = int_to_ptr.hbm [resolvable:$true] %s1344
      %1347 = dma.vmem_to_hbm [thread:$0]  %s1343, 128, %s1345, [#allocation4]
    $region25: #{tpu_custom_call.1} parent=1 // pred_fallthru
      _
    // Predicated region
    $region26: #{tpu_custom_call.1} parent=1 // pred_check
      _
    $region27: #{tpu_custom_call.1} parent=1 // pred_check_branch
      %1349 = sbr.rel (0) target = $region29
    $region28: #{tpu_custom_call.1} parent=1 // pred_region
      %1351 = dma.done [#allocation4], 128
    $region29: #{tpu_custom_call.1} parent=1 // pred_fallthru
      _
    %1352 = vsyncpa [#allocation3], 1
    %1353 = vsyncpa [#allocation6], 1
    %1354 = vsyncpa [#allocation4], 1

</llo_original>
